<compile_context>
chip_gen: v7x
topology: tpu7x:2x2x1
jax: 0.10.0
libtpu: 0.0.40
codegen_flags: <defaults>
</compile_context>

<pallas_src>
import functools

import numpy as np
import jax
import jax.numpy as jnp
from jax import lax
from jax.experimental import pallas as pl
from jax.experimental.pallas import tpu as pltpu


def _round_up(x: int, m: int) -> int:
    return ((x + m - 1) // m) * m


def _pad2d(x, rows, cols, dtype=np.float32):
    out = np.zeros((rows, cols), dtype=dtype)
    out[: x.shape[0], : x.shape[1]] = x
    return out


def _vmem_limit(*nbytes):
    # double-buffer everything + headroom; clamp to a value valid on all gens
    need = 2 * int(sum(nbytes)) + (8 << 20)
    return int(min(max(need, 32 << 20), 64 << 20))


def _params(vmem_bytes):
    return pltpu.CompilerParams(dimension_semantics=("parallel",),
                                vmem_limit_bytes=vmem_bytes)


# ---------------------------------------------------------------------------
# Kernel 1: bond input projection.   inp = f_bonds @ W_i ;  msg0 = relu(inp)
# ---------------------------------------------------------------------------
def _init_kernel(fb_ref, wi_ref, inp_ref, msg_ref):
    h = jnp.dot(fb_ref[...], wi_ref[...], preferred_element_type=jnp.float32)
    inp_ref[...] = h
    msg_ref[...] = jnp.maximum(h, 0.0).astype(msg_ref.dtype)


def _init_call(fb, wi, *, bond_tile):
    bp, fbp = fb.shape
    hp = wi.shape[1]
    vmem = _vmem_limit(bond_tile * fbp * 2, fbp * hp * 2,
                       bond_tile * hp * 4, bond_tile * hp * 2)
    return pl.pallas_call(
        _init_kernel,
        out_shape=(jax.ShapeDtypeStruct((bp, hp), jnp.float32),   # inp residual (f32)
                   jax.ShapeDtypeStruct((bp, hp), jnp.bfloat16)), # msg state   (bf16)
        grid=(bp // bond_tile,),
        in_specs=[pl.BlockSpec((bond_tile, fbp), lambda i: (i, 0)),
                  pl.BlockSpec((fbp, hp), lambda i: (0, 0))],      # W_i VMEM-resident
        out_specs=(pl.BlockSpec((bond_tile, hp), lambda i: (i, 0)),
                   pl.BlockSpec((bond_tile, hp), lambda i: (i, 0))),
        compiler_params=_params(vmem),
    )(fb, wi)


# ---------------------------------------------------------------------------
# Kernel 2: per-atom neighbor sum.   a_sum[a] = sum_j msg[a2b[a, j]]
#   * a2b indices live in SMEM (scalar prefetch); message rows are gathered
#     with dynamic (1, Hp) loads of the VMEM-resident msg array.
#   * 8 rows per chunk -> one dense (8, Hp) store.
# ---------------------------------------------------------------------------
def _atom_sum_kernel(a2b_ref, msg_ref, out_ref, *, max_nb, tile):
    i = pl.program_id(0)

    def chunk(c, carry):
        r0 = i * tile + c * 8
        rows = []
        for r in range(8):                             # 8 independent gather chains
            base = (r0 + r) * max_nb
            acc = msg_ref[pl.ds(a2b_ref[base], 1), :].astype(jnp.float32)
            for j in range(1, max_nb):                 # max_nb is small & static
                acc = acc + msg_ref[pl.ds(a2b_ref[base + j], 1), :].astype(jnp.float32)
            rows.append(acc)
        out_ref[pl.ds(pl.multiple_of(c * 8, 8), 8), :] = jnp.concatenate(rows, axis=0)
        return carry

    lax.fori_loop(0, tile // 8, chunk, 0)


def _atom_sum_call(a2b_flat, msg, *, ap, atom_tile, max_nb):
    bp, hp = msg.shape
    vmem = _vmem_limit(bp * hp * msg.dtype.itemsize, atom_tile * hp * 4)
    kernel = functools.partial(_atom_sum_kernel, max_nb=max_nb, tile=atom_tile)
    return pl.pallas_call(
        kernel,
        out_shape=jax.ShapeDtypeStruct((ap, hp), jnp.float32),
        grid_spec=pltpu.PrefetchScalarGridSpec(
            num_scalar_prefetch=1,
            grid=(ap // atom_tile,),
            in_specs=[pl.BlockSpec((bp, hp), lambda i, a2b: (0, 0))],   # full msg
            out_specs=pl.BlockSpec((atom_tile, hp), lambda i, a2b: (i, 0)),
        ),
        compiler_params=_params(vmem),
    )(a2b_flat, msg)


# ---------------------------------------------------------------------------
# Kernel 3: one message-passing depth step (bond stage).
#   m[b]   = a_sum[b2a[b]] - msg[b2revb[b]]
#   msg'   = relu(inp + m @ W_h)
# ---------------------------------------------------------------------------
def _step_kernel(b2a_ref, b2revb_ref, asum_ref, msg_ref, inp_ref, wh_ref,
                 out_ref, agg_ref, *, tile):
    i = pl.program_id(0)

    def chunk(c, carry):
        r0 = i * tile + c * 8
        rows = []
        for r in range(8):
            g = r0 + r
            a = asum_ref[pl.ds(b2a_ref[g], 1), :]                       # f32
            rev = msg_ref[pl.ds(b2revb_ref[g], 1), :].astype(jnp.float32)
            rows.append(a - rev)
        agg_ref[pl.ds(pl.multiple_of(c * 8, 8), 8), :] = jnp.concatenate(rows, axis=0)
        return carry

    lax.fori_loop(0, tile // 8, chunk, 0)

    h = jnp.dot(agg_ref[...].astype(wh_ref.dtype), wh_ref[...],
                preferred_element_type=jnp.float32)
    out_ref[...] = jnp.maximum(inp_ref[...] + h, 0.0).astype(out_ref.dtype)


def _step_call(b2a, b2revb, a_sum, msg, inp, wh, *, bond_tile):
    bp, hp = msg.shape
    ap = a_sum.shape[0]
    vmem = _vmem_limit(bp * hp * 2, ap * hp * 4, hp * hp * 2,
                       2 * bond_tile * hp * 4, bond_tile * hp * 2,
                       bond_tile * hp * 4)
    kernel = functools.partial(_step_kernel, tile=bond_tile)
    return pl.pallas_call(
        kernel,
        out_shape=jax.ShapeDtypeStruct((bp, hp), jnp.bfloat16),
        grid_spec=pltpu.PrefetchScalarGridSpec(
            num_scalar_prefetch=2,
            grid=(bp // bond_tile,),
            in_specs=[pl.BlockSpec((ap, hp), lambda i, b2a, brev: (0, 0)),  # a_sum (f32)
                      pl.BlockSpec((bp, hp), lambda i, b2a, brev: (0, 0)),  # msg (bf16)
                      pl.BlockSpec((bond_tile, hp), lambda i, b2a, brev: (i, 0)),  # inp
                      pl.BlockSpec((hp, hp), lambda i, b2a, brev: (0, 0))],        # W_h
            out_specs=pl.BlockSpec((bond_tile, hp), lambda i, b2a, brev: (i, 0)),
            scratch_shapes=[pltpu.VMEM((bond_tile, hp), jnp.float32)],
        ),
        compiler_params=_params(vmem),
    )(b2a, b2revb, a_sum, msg, inp, wh)


# ---------------------------------------------------------------------------
# Kernel 4: fused readout (no gather needed — a_sum is already per-atom).
#   a_msg[a]    = a_sum[a] / max_nb          (torch .mean(dim=1) over padded nb)
#   atom_hid[a] = relu(f_atoms[a] @ Wo_atom + a_msg[a] @ Wo_msg + b_o)
# ---------------------------------------------------------------------------
def _readout_kernel(asum_ref, fa_ref, woa_ref, wom_ref, bias_ref, out_ref, *, inv_nb):
    amsg = (asum_ref[...] * inv_nb).astype(wom_ref.dtype)
    h = jnp.dot(fa_ref[...], woa_ref[...], preferred_element_type=jnp.float32)
    h = h + jnp.dot(amsg, wom_ref[...], preferred_element_type=jnp.float32)
    out_ref[...] = jnp.maximum(h + bias_ref[...], 0.0)


def _readout_call(a_sum, fa, woa, wom, bias, *, atom_tile, max_nb):
    ap, hp = a_sum.shape
    fap = fa.shape[1]
    vmem = _vmem_limit(atom_tile * hp * 4, atom_tile * fap * 2,
                       fap * hp * 2, hp * hp * 2, hp * 4, atom_tile * hp * 4)
    kernel = functools.partial(_readout_kernel, inv_nb=1.0 / max_nb)
    return pl.pallas_call(
        kernel,
        out_shape=jax.ShapeDtypeStruct((ap, hp), jnp.float32),
        grid=(ap // atom_tile,),
        in_specs=[pl.BlockSpec((atom_tile, hp), lambda i: (i, 0)),
                  pl.BlockSpec((atom_tile, fap), lambda i: (i, 0)),
                  pl.BlockSpec((fap, hp), lambda i: (0, 0)),
                  pl.BlockSpec((hp, hp), lambda i: (0, 0)),
                  pl.BlockSpec((1, hp), lambda i: (0, 0))],
        out_specs=pl.BlockSpec((atom_tile, hp), lambda i: (i, 0)),
        compiler_params=_params(vmem),
    )(a_sum, fa, woa, wom, bias)


# ---------------------------------------------------------------------------
# Kernel 5: molecule pooling over a_scope (aggregation = 'mean').
#   mol_vec[m] = sum_{a in scope_m} atom_hid[a] / a_size   (zeros if a_size==0)
#   mol_tile molecules per grid step -> one dense (mol_tile, Hp) store.
# ---------------------------------------------------------------------------
def _pool_kernel(start_ref, size_ref, ah_ref, out_ref, *, mol_tile):
    g0 = pl.program_id(0) * mol_tile
    hp = out_ref.shape[1]
    rows = []
    for m in range(mol_tile):                    # static, small tile of molecules
        start = start_ref[g0 + m]
        size = size_ref[g0 + m]

        def body(k, acc, start=start):
            return acc + ah_ref[pl.ds(start + k, 1), :]

        acc = lax.fori_loop(0, size, body, jnp.zeros((1, hp), jnp.float32))
        scale = jnp.where(size > 0,
                          1.0 / jnp.maximum(size, 1).astype(jnp.float32), 0.0)
        rows.append(acc * scale)
    out_ref[...] = jnp.concatenate(rows, axis=0)


def _pool_call(a_start, a_size, atom_hiddens, *, mol_tile):
    ap, hp = atom_hiddens.shape
    mp = a_start.shape[0]
    vmem = _vmem_limit(ap * hp * 4, mol_tile * hp * 4)
    kernel = functools.partial(_pool_kernel, mol_tile=mol_tile)
    return pl.pallas_call(
        kernel,
        out_shape=jax.ShapeDtypeStruct((mp, hp), jnp.float32),
        grid_spec=pltpu.PrefetchScalarGridSpec(
            num_scalar_prefetch=2,
            grid=(mp // mol_tile,),
            in_specs=[pl.BlockSpec((ap, hp), lambda g, s0, s1: (0, 0))],
            out_specs=pl.BlockSpec((mol_tile, hp), lambda g, s0, s1: (g, 0)),
        ),
        compiler_params=_params(vmem),
    )(a_start, a_size, atom_hiddens)


# ---------------------------------------------------------------------------
# Host-side preparation (hoisted out of the per-forward path; cacheable).
# ---------------------------------------------------------------------------
def prepare_mpn_inputs(params, graph, *, bond_tile=256, atom_tile=256, mol_tile=8):
    """Pad/flatten/upload once per batch.  Tiles: 256 rows is MXU-matched on
    v6e/v7x; use 128 on v5e."""
    assert bond_tile % 8 == 0 and atom_tile % 8 == 0 and mol_tile % 8 == 0

    f_atoms = np.asarray(graph["f_atoms"], np.float32)
    f_bonds = np.asarray(graph["f_bonds"], np.float32)
    a2b = np.asarray(graph["a2b"], np.int32)
    b2a = np.asarray(graph["b2a"], np.int32)
    b2revb = np.asarray(graph["b2revb"], np.int32)
    a_scope = graph["a_scope"]

    n_atoms, atom_fdim = f_atoms.shape
    n_bonds, _ = f_bonds.shape
    max_nb = a2b.shape[1]
    n_mols = len(a_scope)

    w_i = np.asarray(params["W_i"], np.float32)     # [bond_fdim, H]   (y = x @ W)
    w_h = np.asarray(params["W_h"], np.float32)     # [H, H]
    w_o = np.asarray(params["W_o"], np.float32)     # [atom_fdim + H, H]
    b_o = np.asarray(params["b_o"], np.float32)     # [H]
    hidden = w_i.shape[1]

    # padded sizes: lanes -> multiple of 128, rows -> multiple of the tile
    hp = _round_up(hidden, 128)
    fap = _round_up(atom_fdim, 128)
    fbp = _round_up(f_bonds.shape[1], 128)
    bp = _round_up(max(n_bonds, bond_tile), bond_tile)
    ap = _round_up(max(n_atoms, atom_tile), atom_tile)
    mp = _round_up(max(n_mols, 1), mol_tile)

    a2b_pad = np.zeros((ap, max_nb), np.int32)
    a2b_pad[:n_atoms] = a2b
    b2a_pad = np.zeros((bp,), np.int32)
    b2a_pad[:n_bonds] = b2a
    b2revb_pad = np.zeros((bp,), np.int32)
    b2revb_pad[:n_bonds] = b2revb

    a_start = np.zeros((mp,), np.int32)
    a_size = np.zeros((mp,), np.int32)
    for m, (s, z) in enumerate(a_scope):
        a_start[m] = s
        a_size[m] = z

    return dict(
        fb=jnp.asarray(_pad2d(f_bonds, bp, fbp)).astype(jnp.bfloat16),
        fa=jnp.asarray(_pad2d(f_atoms, ap, fap)).astype(jnp.bfloat16),
        wi=jnp.asarray(_pad2d(w_i, fbp, hp)).astype(jnp.bfloat16),
        wh=jnp.asarray(_pad2d(w_h, hp, hp)).astype(jnp.bfloat16),
        woa=jnp.asarray(_pad2d(w_o[:atom_fdim], fap, hp)).astype(jnp.bfloat16),
        wom=jnp.asarray(_pad2d(w_o[atom_fdim:], hp, hp)).astype(jnp.bfloat16),
        bo=jnp.asarray(_pad2d(b_o[None, :], 1, hp)),
        a2b_flat=jnp.asarray(a2b_pad.reshape(-1)),
        b2a=jnp.asarray(b2a_pad),
        b2revb=jnp.asarray(b2revb_pad),
        a_start=jnp.asarray(a_start),
        a_size=jnp.asarray(a_size),
        a2b_pad=a2b_pad,
        meta=dict(n_mols=n_mols, hidden=hidden, max_nb=max_nb,
                  bond_tile=bond_tile, atom_tile=atom_tile, mol_tile=mol_tile,
                  bp=bp, ap=ap, hp=hp),
    )


# ---------------------------------------------------------------------------
# Device pipeline (jitted) + wrappers
# ---------------------------------------------------------------------------
@functools.partial(jax.jit, static_argnames=("depth", "max_nb", "bond_tile",
                                              "atom_tile", "mol_tile"))
def _encode(fb, fa, wi, wh, woa, wom, bo, a2b_flat, b2a, b2revb, a_start, a_size,
            *, depth, max_nb, bond_tile, atom_tile, mol_tile):
    ap = fa.shape[0]
    inp, msg = _init_call(fb, wi, bond_tile=bond_tile)
    for _ in range(depth - 1):
        a_sum = _atom_sum_call(a2b_flat, msg, ap=ap, atom_tile=atom_tile, max_nb=max_nb)
        msg = _step_call(b2a, b2revb, a_sum, msg, inp, wh, bond_tile=bond_tile)
    a_sum = _atom_sum_call(a2b_flat, msg, ap=ap, atom_tile=atom_tile, max_nb=max_nb)
    atom_hiddens = _readout_call(a_sum, fa, woa, wom, bo,
                                 atom_tile=atom_tile, max_nb=max_nb)
    return _pool_call(a_start, a_size, atom_hiddens, mol_tile=mol_tile)


def mpn_encoder_forward_prepared(prep, *, depth):
    meta = prep["meta"]
    out = _encode(prep["fb"], prep["fa"], prep["wi"], prep["wh"], prep["woa"],
                  prep["wom"], prep["bo"], prep["a2b_flat"], prep["b2a"],
                  prep["b2revb"], prep["a_start"], prep["a_size"],
                  depth=depth, max_nb=meta["max_nb"],
                  bond_tile=meta["bond_tile"], atom_tile=meta["atom_tile"],
                  mol_tile=meta["mol_tile"])
    return out[:meta["n_mols"], :meta["hidden"]]


def mpn_encoder_forward(params, graph, *, depth,
                        bond_tile=256, atom_tile=256, mol_tile=8):
    """MPNEncoder.forward (atom_messages=False, eval mode)."""
    prep = prepare_mpn_inputs(params, graph, bond_tile=bond_tile,
                              atom_tile=atom_tile, mol_tile=mol_tile)
    return mpn_encoder_forward_prepared(prep, depth=depth)


def mpn_forward(encoder_params_list, graphs, *, depth):
    """MPN.forward: run one encoder per molecule slot, concat on feature dim."""
    encs = [mpn_encoder_forward(p, g, depth=depth)
            for p, g in zip(encoder_params_list, graphs)]
    return jnp.concatenate(encs, axis=1)
    # TODO(synk): atom_descriptors_batch != None path not implemented (it
    # references self.atom_descriptors_layer which the PyTorch __init__ never defines).


# ---------------------------------------------------------------------------
# Pure-JAX reference (mirror of the PyTorch forward) for verification.
# ---------------------------------------------------------------------------
def _reference_forward(f_atoms, f_bonds, a2b, b2a, b2revb, a_scope,
                       w_i, w_h, w_o, b_o, *, depth, matched):
    atom_fdim = f_atoms.shape[1]
    hidden = w_i.shape[1]
    max_nb = a2b.shape[1]
    msg_dtype = jnp.bfloat16 if matched else jnp.float32

    def mm(x, w):
        if matched:
            x = x.astype(jnp.bfloat16)
            w = w.astype(jnp.bfloat16)
        return jnp.dot(x, w, preferred_element_type=jnp.float32)

    inp = mm(f_bonds, w_i)
    message = jnp.maximum(inp, 0.0).astype(msg_dtype)
    for _ in range(depth - 1):
        a_sum = message[a2b].astype(jnp.float32).sum(axis=1)
        m = a_sum[b2a] - message[b2revb].astype(jnp.float32)
        message = jnp.maximum(inp + mm(m, w_h), 0.0).astype(msg_dtype)
    # torch .mean(dim=1) divides by the padded neighbor count max_nb
    a_msg = message[a2b].astype(jnp.float32).sum(axis=1) / max_nb
    atom_hiddens = jnp.maximum(
        mm(f_atoms, w_o[:atom_fdim]) + mm(a_msg, w_o[atom_fdim:]) + b_o, 0.0)
    mol_vecs = []
    for (start, size) in a_scope:
        if size == 0:
            mol_vecs.append(jnp.zeros((hidden,), jnp.float32))
        else:
            mol_vecs.append(atom_hiddens[start:start + size].sum(axis=0) / size)
    return jnp.stack(mol_vecs, axis=0)


# ---------------------------------------------------------------------------
# Deterministic synthetic BatchMolGraph (chemprop layout, index 0 = padding).
# ---------------------------------------------------------------------------
def _build_batch_mol_graph(mol_sizes):
    n_atoms, n_bonds = 1, 1
    a2b = [[]]
    b2a = [0]
    b2revb = [0]
    a_scope = []
    for size in mol_sizes:
        start = n_atoms
        for _ in range(size):
            a2b.append([])
        edges = [(i, i + 1) for i in range(size - 1)]
        if size >= 4:
            edges.append((0, size - 1))       # ring closure
        if size >= 5:
            edges.append((0, 2))              # extra edge -> degree-3 atoms
        for (u, v) in edges:
            au, av = start + u, start + v
            b1, b2 = n_bonds, n_bonds + 1     # directed bonds au->av and av->au
            b2a.extend([au, av])
            a2b[av].append(b1)
            a2b[au].append(b2)
            b2revb.extend([b2, b1])
            n_bonds += 2
        a_scope.append((start, size))
        n_atoms += size
    max_nb = max(1, max(len(lst) for lst in a2b))
    a2b_arr = np.zeros((n_atoms, max_nb), np.int32)
    for a, lst in enumerate(a2b):
        a2b_arr[a, :len(lst)] = lst
    return dict(n_atoms=n_atoms, n_bonds=n_bonds, a2b=a2b_arr,
                b2a=np.asarray(b2a, np.int32),
                b2revb=np.asarray(b2revb, np.int32),
                a_scope=a_scope)


if __name__ == "__main__":
    atom_fdim, bond_fdim, hidden, depth = 28, 42, 32, 3
    mol_sizes = [4, 5, 6, 7, 8, 9, 10, 11] * 5      # multi-tile on atoms & bonds
    mol_sizes.insert(3, 0)                          # empty molecule -> zero-vector path

    topo = _build_batch_mol_graph(mol_sizes)
    n_atoms, n_bonds = topo["n_atoms"], topo["n_bonds"]

    key = jax.random.PRNGKey(0)
    kfa, kfb, kwi, kwh, kwo, kbo = jax.random.split(key, 6)
    f_atoms = jax.random.normal(kfa, (n_atoms, atom_fdim), jnp.float32).at[0].set(0.0)
    f_bonds = jax.random.normal(kfb, (n_bonds, bond_fdim), jnp.float32).at[0].set(0.0)
    w_i = jax.random.normal(kwi, (bond_fdim, hidden), jnp.float32) / np.sqrt(bond_fdim)
    w_h = jax.random.normal(kwh, (hidden, hidden), jnp.float32) / np.sqrt(hidden)
    w_o = jax.random.normal(kwo, (atom_fdim + hidden, hidden),
                            jnp.float32) / np.sqrt(atom_fdim + hidden)
    b_o = 0.1 * jax.random.normal(kbo, (hidden,), jnp.float32)

    params = {"W_i": np.asarray(w_i), "W_h": np.asarray(w_h),
              "W_o": np.asarray(w_o), "b_o": np.asarray(b_o)}
    graph = {"f_atoms": np.asarray(f_atoms), "f_bonds": np.asarray(f_bonds),
             "a2b": topo["a2b"], "b2a": topo["b2a"], "b2revb": topo["b2revb"],
             "a_scope": topo["a_scope"]}

    prep = prepare_mpn_inputs(params, graph)
    meta = prep["meta"]
    bp, ap, hp, max_nb = meta["bp"], meta["ap"], meta["hp"], meta["max_nb"]

    # --- exact integer check of the SMEM-indexed gather (multi-tile) ---------
    row_vals = (np.arange(bp, dtype=np.float32) % 113.0) + 1.0
    msg_probe = jnp.asarray(np.repeat(row_vals[:, None], hp, axis=1))
    a_sum_k = jax.block_until_ready(
        _atom_sum_call(prep["a2b_flat"], msg_probe, ap=ap,
                       atom_tile=meta["atom_tile"], max_nb=max_nb))
    a_sum_exp = row_vals[prep["a2b_pad"]].sum(axis=1)
    assert np.array_equal(np.asarray(a_sum_k),
                          np.repeat(a_sum_exp[:, None], hp, axis=1)), \
        "gather/index mismatch in atom-sum kernel"

    # --- full forward vs references ------------------------------------------
    out = jax.block_until_ready(mpn_encoder_forward_prepared(prep, depth=depth))
    assert out.shape == (len(mol_sizes), hidden)

    a2b_j = jnp.asarray(topo["a2b"])
    b2a_j = jnp.asarray(topo["b2a"])
    b2revb_j = jnp.asarray(topo["b2revb"])
    ref_matched = _reference_forward(f_atoms, f_bonds, a2b_j, b2a_j, b2revb_j,
                                     topo["a_scope"], w_i, w_h, w_o, b_o,
                                     depth=depth, matched=True)
    ref_f32 = _reference_forward(f_atoms, f_bonds, a2b_j, b2a_j, b2revb_j,
                                 topo["a_scope"], w_i, w_h, w_o, b_o,
                                 depth=depth, matched=False)
    out_np = np.asarray(out)
    err_m = float(np.max(np.abs(out_np - np.asarray(ref_matched))))
    err_f = float(np.max(np.abs(out_np - np.asarray(ref_f32))))
    assert np.allclose(out_np, np.asarray(ref_matched), rtol=2e-2, atol=2e-2), \
        f"mismatch vs matched-precision reference, max abs err = {err_m}"
    assert np.allclose(out_np, np.asarray(ref_f32), rtol=1.5e-1, atol=1.5e-1), \
        f"mismatch vs float32 reference beyond bf16 drift, max abs err = {err_f}"
    print("KERNEL_OK")
</pallas_src>

<mosaic_0001>
module attributes {stable_mosaic.version = 11 : i64} {
  func.func @_atom_sum_kernel(%arg0: i32, %arg1: memref<1536xi32, #tpu.memory_space<smem>>, %arg2: memref<768x128xf32, #tpu.memory_space<vmem>>, %arg3: memref<256x128xf32, #tpu.memory_space<vmem>>) attributes {dimension_semantics = [#tpu.dimension_semantics<parallel>], iteration_bounds = array<i64: 2>, scalar_prefetch = 1 : i64, scratch_operands = 0 : i64, tpu.core_type = #tpu.core_type<tc>, window_params = [{pipeline_mode = #tpu.pipeline_mode<synchronous>, transform_indices = @transform_0, window_bounds = array<i64: 768, 128>}, {transform_indices = @transform_1, window_bounds = array<i64: 256, 128>}]} {
    %c0_i32 = arith.constant 0 : i32
    %c32_i32 = arith.constant 32 : i32
    %0 = arith.addi %c0_i32, %c32_i32 : i32
    %c1_i32 = arith.constant 1 : i32
    scf.for %arg4 = %c0_i32 to %0 step %c1_i32  : i32 {
      %c256_i32 = arith.constant 256 : i32
      %1 = arith.muli %arg0, %c256_i32 : i32
      %c8_i32 = arith.constant 8 : i32
      %2 = arith.muli %arg4, %c8_i32 : i32
      %3 = arith.addi %1, %2 : i32
      %c0_i32_1 = arith.constant 0 : i32
      %4 = arith.addi %3, %c0_i32_1 : i32
      %c3_i32 = arith.constant 3 : i32
      %5 = arith.muli %4, %c3_i32 : i32
      %6 = arith.index_cast %5 : i32 to index
      %7 = memref.load %arg1[%6] : memref<1536xi32, #tpu.memory_space<smem>>
      %8 = arith.index_cast %7 : i32 to index
      %c0 = arith.constant 0 : index
      %9 = vector.load %arg2[%8, %c0] : memref<768x128xf32, #tpu.memory_space<vmem>>, vector<1x128xf32>
      %c1_i32_2 = arith.constant 1 : i32
      %10 = arith.addi %5, %c1_i32_2 : i32
      %11 = arith.index_cast %10 : i32 to index
      %12 = memref.load %arg1[%11] : memref<1536xi32, #tpu.memory_space<smem>>
      %13 = arith.index_cast %12 : i32 to index
      %c0_3 = arith.constant 0 : index
      %14 = vector.load %arg2[%13, %c0_3] : memref<768x128xf32, #tpu.memory_space<vmem>>, vector<1x128xf32>
      %15 = arith.addf %9, %14 : vector<1x128xf32>
      %c2_i32 = arith.constant 2 : i32
      %16 = arith.addi %5, %c2_i32 : i32
      %17 = arith.index_cast %16 : i32 to index
      %18 = memref.load %arg1[%17] : memref<1536xi32, #tpu.memory_space<smem>>
      %19 = arith.index_cast %18 : i32 to index
      %c0_4 = arith.constant 0 : index
      %20 = vector.load %arg2[%19, %c0_4] : memref<768x128xf32, #tpu.memory_space<vmem>>, vector<1x128xf32>
      %21 = arith.addf %15, %20 : vector<1x128xf32>
      %c1_i32_5 = arith.constant 1 : i32
      %22 = arith.addi %3, %c1_i32_5 : i32
      %c3_i32_6 = arith.constant 3 : i32
      %23 = arith.muli %22, %c3_i32_6 : i32
      %24 = arith.index_cast %23 : i32 to index
      %25 = memref.load %arg1[%24] : memref<1536xi32, #tpu.memory_space<smem>>
      %26 = arith.index_cast %25 : i32 to index
      %c0_7 = arith.constant 0 : index
      %27 = vector.load %arg2[%26, %c0_7] : memref<768x128xf32, #tpu.memory_space<vmem>>, vector<1x128xf32>
      %c1_i32_8 = arith.constant 1 : i32
      %28 = arith.addi %23, %c1_i32_8 : i32
      %29 = arith.index_cast %28 : i32 to index
      %30 = memref.load %arg1[%29] : memref<1536xi32, #tpu.memory_space<smem>>
      %31 = arith.index_cast %30 : i32 to index
      %c0_9 = arith.constant 0 : index
      %32 = vector.load %arg2[%31, %c0_9] : memref<768x128xf32, #tpu.memory_space<vmem>>, vector<1x128xf32>
      %33 = arith.addf %27, %32 : vector<1x128xf32>
      %c2_i32_10 = arith.constant 2 : i32
      %34 = arith.addi %23, %c2_i32_10 : i32
      %35 = arith.index_cast %34 : i32 to index
      %36 = memref.load %arg1[%35] : memref<1536xi32, #tpu.memory_space<smem>>
      %37 = arith.index_cast %36 : i32 to index
      %c0_11 = arith.constant 0 : index
      %38 = vector.load %arg2[%37, %c0_11] : memref<768x128xf32, #tpu.memory_space<vmem>>, vector<1x128xf32>
      %39 = arith.addf %33, %38 : vector<1x128xf32>
      %c2_i32_12 = arith.constant 2 : i32
      %40 = arith.addi %3, %c2_i32_12 : i32
      %c3_i32_13 = arith.constant 3 : i32
      %41 = arith.muli %40, %c3_i32_13 : i32
      %42 = arith.index_cast %41 : i32 to index
      %43 = memref.load %arg1[%42] : memref<1536xi32, #tpu.memory_space<smem>>
      %44 = arith.index_cast %43 : i32 to index
      %c0_14 = arith.constant 0 : index
      %45 = vector.load %arg2[%44, %c0_14] : memref<768x128xf32, #tpu.memory_space<vmem>>, vector<1x128xf32>
      %c1_i32_15 = arith.constant 1 : i32
      %46 = arith.addi %41, %c1_i32_15 : i32
      %47 = arith.index_cast %46 : i32 to index
      %48 = memref.load %arg1[%47] : memref<1536xi32, #tpu.memory_space<smem>>
      %49 = arith.index_cast %48 : i32 to index
      %c0_16 = arith.constant 0 : index
      %50 = vector.load %arg2[%49, %c0_16] : memref<768x128xf32, #tpu.memory_space<vmem>>, vector<1x128xf32>
      %51 = arith.addf %45, %50 : vector<1x128xf32>
      %c2_i32_17 = arith.constant 2 : i32
      %52 = arith.addi %41, %c2_i32_17 : i32
      %53 = arith.index_cast %52 : i32 to index
      %54 = memref.load %arg1[%53] : memref<1536xi32, #tpu.memory_space<smem>>
      %55 = arith.index_cast %54 : i32 to index
      %c0_18 = arith.constant 0 : index
      %56 = vector.load %arg2[%55, %c0_18] : memref<768x128xf32, #tpu.memory_space<vmem>>, vector<1x128xf32>
      %57 = arith.addf %51, %56 : vector<1x128xf32>
      %c3_i32_19 = arith.constant 3 : i32
      %58 = arith.addi %3, %c3_i32_19 : i32
      %c3_i32_20 = arith.constant 3 : i32
      %59 = arith.muli %58, %c3_i32_20 : i32
      %60 = arith.index_cast %59 : i32 to index
      %61 = memref.load %arg1[%60] : memref<1536xi32, #tpu.memory_space<smem>>
      %62 = arith.index_cast %61 : i32 to index
      %c0_21 = arith.constant 0 : index
      %63 = vector.load %arg2[%62, %c0_21] : memref<768x128xf32, #tpu.memory_space<vmem>>, vector<1x128xf32>
      %c1_i32_22 = arith.constant 1 : i32
      %64 = arith.addi %59, %c1_i32_22 : i32
      %65 = arith.index_cast %64 : i32 to index
      %66 = memref.load %arg1[%65] : memref<1536xi32, #tpu.memory_space<smem>>
      %67 = arith.index_cast %66 : i32 to index
      %c0_23 = arith.constant 0 : index
      %68 = vector.load %arg2[%67, %c0_23] : memref<768x128xf32, #tpu.memory_space<vmem>>, vector<1x128xf32>
      %69 = arith.addf %63, %68 : vector<1x128xf32>
      %c2_i32_24 = arith.constant 2 : i32
      %70 = arith.addi %59, %c2_i32_24 : i32
      %71 = arith.index_cast %70 : i32 to index
      %72 = memref.load %arg1[%71] : memref<1536xi32, #tpu.memory_space<smem>>
      %73 = arith.index_cast %72 : i32 to index
      %c0_25 = arith.constant 0 : index
      %74 = vector.load %arg2[%73, %c0_25] : memref<768x128xf32, #tpu.memory_space<vmem>>, vector<1x128xf32>
      %75 = arith.addf %69, %74 : vector<1x128xf32>
      %c4_i32 = arith.constant 4 : i32
      %76 = arith.addi %3, %c4_i32 : i32
      %c3_i32_26 = arith.constant 3 : i32
      %77 = arith.muli %76, %c3_i32_26 : i32
      %78 = arith.index_cast %77 : i32 to index
      %79 = memref.load %arg1[%78] : memref<1536xi32, #tpu.memory_space<smem>>
      %80 = arith.index_cast %79 : i32 to index
      %c0_27 = arith.constant 0 : index
      %81 = vector.load %arg2[%80, %c0_27] : memref<768x128xf32, #tpu.memory_space<vmem>>, vector<1x128xf32>
      %c1_i32_28 = arith.constant 1 : i32
      %82 = arith.addi %77, %c1_i32_28 : i32
      %83 = arith.index_cast %82 : i32 to index
      %84 = memref.load %arg1[%83] : memref<1536xi32, #tpu.memory_space<smem>>
      %85 = arith.index_cast %84 : i32 to index
      %c0_29 = arith.constant 0 : index
      %86 = vector.load %arg2[%85, %c0_29] : memref<768x128xf32, #tpu.memory_space<vmem>>, vector<1x128xf32>
      %87 = arith.addf %81, %86 : vector<1x128xf32>
      %c2_i32_30 = arith.constant 2 : i32
      %88 = arith.addi %77, %c2_i32_30 : i32
      %89 = arith.index_cast %88 : i32 to index
      %90 = memref.load %arg1[%89] : memref<1536xi32, #tpu.memory_space<smem>>
      %91 = arith.index_cast %90 : i32 to index
      %c0_31 = arith.constant 0 : index
      %92 = vector.load %arg2[%91, %c0_31] : memref<768x128xf32, #tpu.memory_space<vmem>>, vector<1x128xf32>
      %93 = arith.addf %87, %92 : vector<1x128xf32>
      %c5_i32 = arith.constant 5 : i32
      %94 = arith.addi %3, %c5_i32 : i32
      %c3_i32_32 = arith.constant 3 : i32
      %95 = arith.muli %94, %c3_i32_32 : i32
      %96 = arith.index_cast %95 : i32 to index
      %97 = memref.load %arg1[%96] : memref<1536xi32, #tpu.memory_space<smem>>
      %98 = arith.index_cast %97 : i32 to index
      %c0_33 = arith.constant 0 : index
      %99 = vector.load %arg2[%98, %c0_33] : memref<768x128xf32, #tpu.memory_space<vmem>>, vector<1x128xf32>
      %c1_i32_34 = arith.constant 1 : i32
      %100 = arith.addi %95, %c1_i32_34 : i32
      %101 = arith.index_cast %100 : i32 to index
      %102 = memref.load %arg1[%101] : memref<1536xi32, #tpu.memory_space<smem>>
      %103 = arith.index_cast %102 : i32 to index
      %c0_35 = arith.constant 0 : index
      %104 = vector.load %arg2[%103, %c0_35] : memref<768x128xf32, #tpu.memory_space<vmem>>, vector<1x128xf32>
      %105 = arith.addf %99, %104 : vector<1x128xf32>
      %c2_i32_36 = arith.constant 2 : i32
      %106 = arith.addi %95, %c2_i32_36 : i32
      %107 = arith.index_cast %106 : i32 to index
      %108 = memref.load %arg1[%107] : memref<1536xi32, #tpu.memory_space<smem>>
      %109 = arith.index_cast %108 : i32 to index
      %c0_37 = arith.constant 0 : index
      %110 = vector.load %arg2[%109, %c0_37] : memref<768x128xf32, #tpu.memory_space<vmem>>, vector<1x128xf32>
      %111 = arith.addf %105, %110 : vector<1x128xf32>
      %c6_i32 = arith.constant 6 : i32
      %112 = arith.addi %3, %c6_i32 : i32
      %c3_i32_38 = arith.constant 3 : i32
      %113 = arith.muli %112, %c3_i32_38 : i32
      %114 = arith.index_cast %113 : i32 to index
      %115 = memref.load %arg1[%114] : memref<1536xi32, #tpu.memory_space<smem>>
      %116 = arith.index_cast %115 : i32 to index
      %c0_39 = arith.constant 0 : index
      %117 = vector.load %arg2[%116, %c0_39] : memref<768x128xf32, #tpu.memory_space<vmem>>, vector<1x128xf32>
      %c1_i32_40 = arith.constant 1 : i32
      %118 = arith.addi %113, %c1_i32_40 : i32
      %119 = arith.index_cast %118 : i32 to index
      %120 = memref.load %arg1[%119] : memref<1536xi32, #tpu.memory_space<smem>>
      %121 = arith.index_cast %120 : i32 to index
      %c0_41 = arith.constant 0 : index
      %122 = vector.load %arg2[%121, %c0_41] : memref<768x128xf32, #tpu.memory_space<vmem>>, vector<1x128xf32>
      %123 = arith.addf %117, %122 : vector<1x128xf32>
      %c2_i32_42 = arith.constant 2 : i32
      %124 = arith.addi %113, %c2_i32_42 : i32
      %125 = arith.index_cast %124 : i32 to index
      %126 = memref.load %arg1[%125] : memref<1536xi32, #tpu.memory_space<smem>>
      %127 = arith.index_cast %126 : i32 to index
      %c0_43 = arith.constant 0 : index
      %128 = vector.load %arg2[%127, %c0_43] : memref<768x128xf32, #tpu.memory_space<vmem>>, vector<1x128xf32>
      %129 = arith.addf %123, %128 : vector<1x128xf32>
      %c7_i32 = arith.constant 7 : i32
      %130 = arith.addi %3, %c7_i32 : i32
      %c3_i32_44 = arith.constant 3 : i32
      %131 = arith.muli %130, %c3_i32_44 : i32
      %132 = arith.index_cast %131 : i32 to index
      %133 = memref.load %arg1[%132] : memref<1536xi32, #tpu.memory_space<smem>>
      %134 = arith.index_cast %133 : i32 to index
      %c0_45 = arith.constant 0 : index
      %135 = vector.load %arg2[%134, %c0_45] : memref<768x128xf32, #tpu.memory_space<vmem>>, vector<1x128xf32>
      %c1_i32_46 = arith.constant 1 : i32
      %136 = arith.addi %131, %c1_i32_46 : i32
      %137 = arith.index_cast %136 : i32 to index
      %138 = memref.load %arg1[%137] : memref<1536xi32, #tpu.memory_space<smem>>
      %139 = arith.index_cast %138 : i32 to index
      %c0_47 = arith.constant 0 : index
      %140 = vector.load %arg2[%139, %c0_47] : memref<768x128xf32, #tpu.memory_space<vmem>>, vector<1x128xf32>
      %141 = arith.addf %135, %140 : vector<1x128xf32>
      %c2_i32_48 = arith.constant 2 : i32
      %142 = arith.addi %131, %c2_i32_48 : i32
      %143 = arith.index_cast %142 : i32 to index
      %144 = memref.load %arg1[%143] : memref<1536xi32, #tpu.memory_space<smem>>
      %145 = arith.index_cast %144 : i32 to index
      %c0_49 = arith.constant 0 : index
      %146 = vector.load %arg2[%145, %c0_49] : memref<768x128xf32, #tpu.memory_space<vmem>>, vector<1x128xf32>
      %147 = arith.addf %141, %146 : vector<1x128xf32>
      %148 = tpu.concatenate %21, %39, %57, %75, %93, %111, %129, %147 in 0 : vector<1x128xf32>, vector<1x128xf32>, vector<1x128xf32>, vector<1x128xf32>, vector<1x128xf32>, vector<1x128xf32>, vector<1x128xf32>, vector<1x128xf32> -> vector<8x128xf32>
      %c8_i32_50 = arith.constant 8 : i32
      %149 = arith.muli %arg4, %c8_i32_50 : i32
      %150 = tpu.assume_multiple %149, 8 : i32
      %151 = arith.index_cast %150 : i32 to index
      %c0_51 = arith.constant 0 : index
      %152 = vector.load %arg3[%151, %c0_51] : memref<256x128xf32, #tpu.memory_space<vmem>>, vector<8x128xf32>
      tpu.vector_store %arg3[%151, %c0_51], %148 {strides = array<i32>} : memref<256x128xf32, #tpu.memory_space<vmem>>, vector<8x128xf32>,
    }
    %c32_i32_0 = arith.constant 32 : i32
    return
  }
  func.func @transform_0(%arg0: i32, %arg1: memref<1536xi32, #tpu.memory_space<smem>>) -> (i32, i32) {
    %c0_i32 = arith.constant 0 : i32
    %c0_i32_0 = arith.constant 0 : i32
    %c0_i32_1 = arith.constant 0 : i32
    return %c0_i32, %c0_i32_0 : i32, i32
  }
  func.func @transform_1(%arg0: i32, %arg1: memref<1536xi32, #tpu.memory_space<smem>>) -> (i32, i32) {
    %c0_i32 = arith.constant 0 : i32
    %c0_i32_0 = arith.constant 0 : i32
    return %arg0, %c0_i32 : i32, i32
  }
}

</mosaic_0001>

<llo_original>
// kernel: tpu_custom_call.1
$region0: #{tpu_custom_call.1}
  #allocation0 [shape = 'u32[]', space=smem, size = 0x4, offset = 0x4, fixed_abs, tag = 'smem constant byte address 0x4 - core index']
  #allocation1 [shape = 'u32[144,128]{1,0:T(1,128)}', space=vmem, size = 0x12000, scoped, tag = 'internal scratch']
  #allocation2 [shape = 's32[1]{0}', space=sflag, size = 0x4, scoped, tag = 'scoped memory for tpu_custom_call.1']
  #allocation3 [shape = 'u8[6144]{0}', space=smem, size = 0x1800, scoped, tag = 'prefetched SMEM operand 0']
  %s0 = inlined_call_operand.hbm [shape: s32[1536], index: 0, kind: input, shape index: {}]
  %s1 = inlined_call_operand.hbm [shape: f32[768,128], index: 1, kind: input, shape index: {}]
  %s2 = inlined_call_operand.hbm [shape: f32[512,128], index: 2, kind: output, shape index: {}]
  %s3 = sld [smem:[#allocation0]]
  $region48: #{tpu_custom_call.1} parent=0
    _
  %s5 = ssub.s32 1, %s3
  %s6 = scalar_select 0, %s5, %s3
  %8 = dma.hbm_to_smem %s0, 192, [#allocation3], [#allocation2]
  %9 = dma.done [#allocation2], 192
  %10 = sfence
  $region1: #{tpu_custom_call.1} parent=0
    #allocation4 [shape = 'u8[393216]{0}', space=vmem, size = 0x60000, scoped, tag = 'input window, operand 1, single buffered']
    #allocation5 [shape = 's32[2]{0}', space=sflag, size = 0x8, scoped, tag = 'scoped memory for tpu_custom_call.1']
    #allocation6 [shape = 's32[2]{0}', space=sflag, size = 0x8, scoped, tag = 'scoped memory for tpu_custom_call.1']
    #allocation7 [shape = 'u8[262144]{0}', space=vmem, size = 0x40000, scoped, tag = 'output window, operand 0']
    %11 = vsyncpa [#allocation5], 0
    %12 = vsyncpa [#allocation6], 0
    %s13 = scalar_lea.sflag [#allocation6], 1
    %14 = vsyncpa %s13, 0
    loop: start=0, step=1, limit=4
    $region2: #{tpu_custom_call.1} parent=1 // loop_pre_header
      _
    $region3: #{tpu_custom_call.1} parent=1 // loop_header
      %s16 = sphi 0, %s20
      %p17 = scmp.ge.s32.totalorder %s16, 4
      %s24 = sphi 0, %s24
      %s26 = sphi 0, %s24
      %s27 = sphi 0, %s26
      %s41 = sphi 0, %s27
      %s47 = sphi 0, %s49
      %s50 = sphi 0, %s47
      %s51 = sphi 0, %s50
      %s67 = sphi 0, %s51
    $region4: #{tpu_custom_call.1} parent=1 // loop_header_branch
      %19 = sbr.rel (%p17) target = $region8
    $region5: #{tpu_custom_call.1} parent=1 // loop_body
      %s21 = ssub.s32 %s16, 1
      %s22 = ssub.s32 %s16, 2
      %s23 = sadd.s32 %s16, 1
      %s25 = sadd.s32 %s24, 1
      %p28 = scmp.eq.s32.totalorder %s16, 1
      %p29 = scmp.ne.s32.totalorder %s24, %s26
      %p30 = scmp.eq.s32.totalorder %s16, 0
      %p31 = por %p29, %p30
      %p32 = scmp.ne.s32.totalorder %s24, %s26
      %p33 = scmp.eq.s32.totalorder %s21, 1
      %p34 = por %p32, %p33
      %p35 = scmp.ne.s32.totalorder %s26, %s27
      %p36 = scmp.eq.s32.totalorder %s21, 0
      %p37 = por %p35, %p36
      %p38 = scmp.ne.s32.totalorder %s26, %s27
      %p39 = scmp.eq.s32.totalorder %s22, 1
      %p40 = por %p38, %p39
      %p42 = scmp.ne.s32.totalorder %s27, %s41
      %p43 = scmp.eq.s32.totalorder %s22, 0
      %p44 = por %p42, %p43
      %s45 = ssub.s32 %s16, %s23
      %p46 = scmp.eq.s32.totalorder %s45, 0
      %s48 = sadd.s32 %s47, 1
      %s49 = scalar_select %p46, %s47, %s48
      %p52 = pneg %p46
      %p53 = scmp.eq.s32.totalorder %s16, 1
      %p54 = por %p52, %p53
      %p55 = scmp.ne.s32.totalorder %s47, %s50
      %p56 = scmp.eq.s32.totalorder %s16, 0
      %p57 = por %p55, %p56
      %p58 = scmp.ne.s32.totalorder %s47, %s50
      %p59 = scmp.eq.s32.totalorder %s21, 1
      %p60 = por %p58, %p59
      %p61 = scmp.ne.s32.totalorder %s50, %s51
      %p62 = scmp.eq.s32.totalorder %s21, 0
      %p63 = por %p61, %p62
      %p64 = scmp.ne.s32.totalorder %s50, %s51
      %p65 = scmp.eq.s32.totalorder %s22, 1
      %p66 = por %p64, %p65
      %p68 = scmp.ne.s32.totalorder %s51, %s67
      %p69 = scmp.eq.s32.totalorder %s22, 0
      %p70 = por %p68, %p69
      %p71 = scmp.le.s32.totalorder 1, %s16
      %p72 = scmp.lt.s32.totalorder %s16, 3
      %p73 = pnand %p71, %p72
      %p74 = pneg %p73
      // Predicated region
      $region9: #{tpu_custom_call.1} parent=5 // pred_check
        _
      $region10: #{tpu_custom_call.1} parent=5 // pred_check_branch
        %76 = sbr.rel (%p73) target = $region12
      $region11: #{tpu_custom_call.1} parent=5 // pred_region
        %s77 = ssub.s32 %s16, 1
        // Predicated region
        $region13: #{tpu_custom_call.1} parent=11 // pred_check
          %p78 = pneg %p37
        $region14: #{tpu_custom_call.1} parent=11 // pred_check_branch
          %80 = sbr.rel (%p78) target = $region16
        $region15: #{tpu_custom_call.1} parent=11 // pred_region
          %s82 = ssub.s32 12288, 12288
          %83 = vsyncadd [#allocation5], %s82
          %s84 = sshll.u32 [#allocation4], 4
          %s85 = int_to_ptr.vmem [resolvable:$true] %s84
          %90 = dma.hbm_to_vmem [thread:$0]  %s1, 12288, %s85, [#allocation5], 128, 128, 8
        $region16: #{tpu_custom_call.1} parent=11 // pred_fallthru
          _
      $region12: #{tpu_custom_call.1} parent=5 // pred_fallthru
        _
      %p91 = scmp.lt.s32.totalorder %s16, 2
      // Predicated region
      $region17: #{tpu_custom_call.1} parent=5 // pred_check
        %p92 = pneg %p91
      $region18: #{tpu_custom_call.1} parent=5 // pred_check_branch
        %94 = sbr.rel (%p92) target = $region20
      $region19: #{tpu_custom_call.1} parent=5 // pred_region
        _
      $region20: #{tpu_custom_call.1} parent=5 // pred_fallthru
        _
      %p95 = scmp.le.s32.totalorder 1, %s16
      %p96 = scmp.lt.s32.totalorder %s16, 3
      %p97 = pnand %p95, %p96
      %p98 = pneg %p97
      // Predicated region
      $region21: #{tpu_custom_call.1} parent=5 // pred_check
        _
      $region22: #{tpu_custom_call.1} parent=5 // pred_check_branch
        %100 = sbr.rel (%p97) target = $region24
      $region23: #{tpu_custom_call.1} parent=5 // pred_region
        %s101 = ssub.s32 %s16, 1
        // Predicated region
        $region25: #{tpu_custom_call.1} parent=23 // pred_check
          %p102 = pneg %p37
        $region26: #{tpu_custom_call.1} parent=23 // pred_check_branch
          %104 = sbr.rel (%p102) target = $region28
        $region27: #{tpu_custom_call.1} parent=23 // pred_region
          %105 = dma.done [#allocation5], 12288
        $region28: #{tpu_custom_call.1} parent=23 // pred_fallthru
          _
        %p106 = pneg %p37
        %p107 = pneg %p34
        %p108 = pneg %p63
        %p109 = pneg %p60
        %s110 = sand.u32 %s50, 1
        %s111 = scalar_lea.sflag [#allocation6], %s110
        %s112 = sand.u32 %s50, 1
        %s113 = smul.addr %s112, 256
        %s114 = scalar_lea.vmem [#allocation7], %s113
        %s115 = smul.u32 32, %s21
        loop: start=0, step=1, limit=32
        $region29: #{tpu_custom_call.1} parent=23 // loop_pre_header
          _
        $region30: #{tpu_custom_call.1} parent=23 // loop_header
          %s117 = sphi 0, %s121
          %p118 = scmp.ge.s32.totalorder %s117, 32
        $region31: #{tpu_custom_call.1} parent=23 // loop_header_branch
          %120 = sbr.rel (%p118) target = $region35
        $region32: #{tpu_custom_call.1} parent=23 // loop_body
          %s122 = smul.u32 %s21, 256
          %s123 = smul.u32 %s117, 8
          %s124 = sadd.s32 %s122, %s123
          %s125 = smul.u32 %s124, 3
          %s126 = sld [smem:[#allocation3 + %s125]]
          %s127 = scalar_lea.vmem [#allocation4], %s126
          %v128 = vld [vmem:[%s127] sm:$0x1]
          %s129 = sadd.s32 %s125, 1
          %s130 = sld [smem:[#allocation3 + %s129]]
          %s131 = scalar_lea.vmem [#allocation4], %s130
          %v132 = vld [vmem:[%s131] sm:$0x1]
          %v133 = vadd.f32 %v128, %v132
          %s134 = sadd.s32 %s125, 2
          %s135 = sld [smem:[#allocation3 + %s134]]
          %s136 = scalar_lea.vmem [#allocation4], %s135
          %v137 = vld [vmem:[%s136] sm:$0x1]
          %v138 = vadd.f32 %v133, %v137
          %s139 = sadd.s32 %s124, 1
          %s140 = smul.u32 %s139, 3
          %s141 = sld [smem:[#allocation3 + %s140]]
          %s142 = scalar_lea.vmem [#allocation4], %s141
          %v143 = vld [vmem:[%s142] sm:$0x1]
          %s144 = sadd.s32 %s140, 1
          %s145 = sld [smem:[#allocation3 + %s144]]
          %s146 = scalar_lea.vmem [#allocation4], %s145
          %v147 = vld [vmem:[%s146] sm:$0x1]
          %v148 = vadd.f32 %v143, %v147
          %s149 = sadd.s32 %s140, 2
          %s150 = sld [smem:[#allocation3 + %s149]]
          %s151 = scalar_lea.vmem [#allocation4], %s150
          %v152 = vld [vmem:[%s151] sm:$0x1]
          %v153 = vadd.f32 %v148, %v152
          %s154 = sadd.s32 %s124, 2
          %s155 = smul.u32 %s154, 3
          %s156 = sld [smem:[#allocation3 + %s155]]
          %s157 = scalar_lea.vmem [#allocation4], %s156
          %v158 = vld [vmem:[%s157] sm:$0x1]
          %s159 = sadd.s32 %s155, 1
          %s160 = sld [smem:[#allocation3 + %s159]]
          %s161 = scalar_lea.vmem [#allocation4], %s160
          %v162 = vld [vmem:[%s161] sm:$0x1]
          %v163 = vadd.f32 %v158, %v162
          %s164 = sadd.s32 %s155, 2
          %s165 = sld [smem:[#allocation3 + %s164]]
          %s166 = scalar_lea.vmem [#allocation4], %s165
          %v167 = vld [vmem:[%s166] sm:$0x1]
          %v168 = vadd.f32 %v163, %v167
          %s169 = sadd.s32 %s124, 3
          %s170 = smul.u32 %s169, 3
          %s171 = sld [smem:[#allocation3 + %s170]]
          %s172 = scalar_lea.vmem [#allocation4], %s171
          %v173 = vld [vmem:[%s172] sm:$0x1]
          %s174 = sadd.s32 %s170, 1
          %s175 = sld [smem:[#allocation3 + %s174]]
          %s176 = scalar_lea.vmem [#allocation4], %s175
          %v177 = vld [vmem:[%s176] sm:$0x1]
          %v178 = vadd.f32 %v173, %v177
          %s179 = sadd.s32 %s170, 2
          %s180 = sld [smem:[#allocation3 + %s179]]
          %s181 = scalar_lea.vmem [#allocation4], %s180
          %v182 = vld [vmem:[%s181] sm:$0x1]
          %v183 = vadd.f32 %v178, %v182
          %s184 = sadd.s32 %s124, 4
          %s185 = smul.u32 %s184, 3
          %s186 = sld [smem:[#allocation3 + %s185]]
          %s187 = scalar_lea.vmem [#allocation4], %s186
          %v188 = vld [vmem:[%s187] sm:$0x1]
          %s189 = sadd.s32 %s185, 1
          %s190 = sld [smem:[#allocation3 + %s189]]
          %s191 = scalar_lea.vmem [#allocation4], %s190
          %v192 = vld [vmem:[%s191] sm:$0x1]
          %v193 = vadd.f32 %v188, %v192
          %s194 = sadd.s32 %s185, 2
          %s195 = sld [smem:[#allocation3 + %s194]]
          %s196 = scalar_lea.vmem [#allocation4], %s195
          %v197 = vld [vmem:[%s196] sm:$0x1]
          %v198 = vadd.f32 %v193, %v197
          %s199 = sadd.s32 %s124, 5
          %s200 = smul.u32 %s199, 3
          %s201 = sld [smem:[#allocation3 + %s200]]
          %s202 = scalar_lea.vmem [#allocation4], %s201
          %v203 = vld [vmem:[%s202] sm:$0x1]
          %s204 = sadd.s32 %s200, 1
          %s205 = sld [smem:[#allocation3 + %s204]]
          %s206 = scalar_lea.vmem [#allocation4], %s205
          %v207 = vld [vmem:[%s206] sm:$0x1]
          %v208 = vadd.f32 %v203, %v207
          %s209 = sadd.s32 %s200, 2
          %s210 = sld [smem:[#allocation3 + %s209]]
          %s211 = scalar_lea.vmem [#allocation4], %s210
          %v212 = vld [vmem:[%s211] sm:$0x1]
          %v213 = vadd.f32 %v208, %v212
          %s214 = sadd.s32 %s124, 6
          %s215 = smul.u32 %s214, 3
          %s216 = sld [smem:[#allocation3 + %s215]]
          %s217 = scalar_lea.vmem [#allocation4], %s216
          %v218 = vld [vmem:[%s217] sm:$0x1]
          %s219 = sadd.s32 %s215, 1
          %s220 = sld [smem:[#allocation3 + %s219]]
          %s221 = scalar_lea.vmem [#allocation4], %s220
          %v222 = vld [vmem:[%s221] sm:$0x1]
          %v223 = vadd.f32 %v218, %v222
          %s224 = sadd.s32 %s215, 2
          %s225 = sld [smem:[#allocation3 + %s224]]
          %s226 = scalar_lea.vmem [#allocation4], %s225
          %v227 = vld [vmem:[%s226] sm:$0x1]
          %v228 = vadd.f32 %v223, %v227
          %s229 = sadd.s32 %s124, 7
          %s230 = smul.u32 %s229, 3
          %s231 = sld [smem:[#allocation3 + %s230]]
          %s232 = scalar_lea.vmem [#allocation4], %s231
          %v233 = vld [vmem:[%s232] sm:$0x1]
          %s234 = sadd.s32 %s230, 1
          %s235 = sld [smem:[#allocation3 + %s234]]
          %s236 = scalar_lea.vmem [#allocation4], %s235
          %v237 = vld [vmem:[%s236] sm:$0x1]
          %v238 = vadd.f32 %v233, %v237
          %s239 = sadd.s32 %s230, 2
          %s240 = sld [smem:[#allocation3 + %s239]]
          %s241 = scalar_lea.vmem [#allocation4], %s240
          %v242 = vld [vmem:[%s241] sm:$0x1]
          %v243 = vadd.f32 %v238, %v242
          %v245 = vrot.slane %v153, 7
          %v248 = vrot.slane %v168, 6
          %v251 = vrot.slane %v183, 5
          %v254 = vrot.slane %v198, 4
          %v257 = vrot.slane %v213, 3
          %v260 = vrot.slane %v228, 2
          %v263 = vrot.slane %v243, 1
          %vm265 = vcmask 1040384
          %v266 = vsel %vm265, %v138, %v245
          %vm267 = vcmask 1041408
          %v268 = vsel %vm267, %v266, %v248
          %vm269 = vcmask 1042432
          %v270 = vsel %vm269, %v268, %v251
          %vm271 = vcmask 1043456
          %v272 = vsel %vm271, %v270, %v254
          %vm273 = vcmask 1044480
          %v274 = vsel %vm273, %v272, %v257
          %vm275 = vcmask 1045504
          %v276 = vsel %vm275, %v274, %v260
          %vm277 = vcmask 1046528
          %v278 = vsel %vm277, %v276, %v263
          %s279 = scalar_lea.vmem %s114, %s123 [#allocation7]
          %280 = vst [vmem:[%s279] sm:$0xff] %v278
        $region33: #{tpu_custom_call.1} parent=23 // loop_footer
          %s121 = sadd.s32 1, %s117
        $region34: #{tpu_custom_call.1} parent=23 // loop_footer_branch
          %116 = sbr.rel target = $region30
        $region35: #{tpu_custom_call.1} parent=23 // loop_exit
          _
        %s281 = sand.u32 %s50, 1
        %s282 = scalar_lea.sflag [#allocation6], %s281
        %s283 = sand.u32 %s50, 1
        %s284 = smul.addr %s283, 256
        %s285 = scalar_lea.vmem [#allocation7], %s284
        // Predicated region
        $region36: #{tpu_custom_call.1} parent=23 // pred_check
          %p286 = pneg %p60
        $region37: #{tpu_custom_call.1} parent=23 // pred_check_branch
          %288 = sbr.rel (%p286) target = $region39
        $region38: #{tpu_custom_call.1} parent=23 // pred_region
          %s289 = smul.u32 32, %s21
          %s291 = ssub.s32 4096, 4096
          %292 = vsyncadd %s282, %s291
          %s293 = smul.addr %s289, 128
          %s294 = scalar_lea.hbm %s2, %s293
          %s295 = sshll.u32 %s285, 4
          %s296 = int_to_ptr.vmem [resolvable:$true] %s295
          %301 = dma.vmem_to_hbm [thread:$0]  %s296, 4096, %s294, %s282, 128, 128, 8
        $region39: #{tpu_custom_call.1} parent=23 // pred_fallthru
          _
      $region24: #{tpu_custom_call.1} parent=5 // pred_fallthru
        _
      %p302 = scmp.le.s32.totalorder 2, %s16
      // Predicated region
      $region40: #{tpu_custom_call.1} parent=5 // pred_check
        %p303 = pneg %p302
      $region41: #{tpu_custom_call.1} parent=5 // pred_check_branch
        %305 = sbr.rel (%p303) target = $region43
      $region42: #{tpu_custom_call.1} parent=5 // pred_region
        %s306 = ssub.s32 %s16, 2
        // Predicated region
        $region44: #{tpu_custom_call.1} parent=42 // pred_check
          %p307 = pneg %p66
        $region45: #{tpu_custom_call.1} parent=42 // pred_check_branch
          %309 = sbr.rel (%p307) target = $region47
        $region46: #{tpu_custom_call.1} parent=42 // pred_region
          %s310 = sand.u32 %s51, 1
          %s311 = scalar_lea.sflag [#allocation6], %s310
          %s312 = sand.u32 %s51, 1
          %s313 = smul.addr %s312, 256
          %s314 = scalar_lea.vmem [#allocation7], %s313
          %315 = dma.done %s311, 4096
        $region47: #{tpu_custom_call.1} parent=42 // pred_fallthru
          _
      $region43: #{tpu_custom_call.1} parent=5 // pred_fallthru
        _
    $region6: #{tpu_custom_call.1} parent=1 // loop_footer
      %s20 = sadd.s32 1, %s16
    $region7: #{tpu_custom_call.1} parent=1 // loop_footer_branch
      %15 = sbr.rel target = $region3
    $region8: #{tpu_custom_call.1} parent=1 // loop_exit
      _
    %316 = vsyncpa [#allocation5], 1
    %s317 = scalar_lea.sflag [#allocation5], 1
    %318 = vsyncpa %s317, 1
    %319 = vsyncpa [#allocation6], 1
    %s320 = scalar_lea.sflag [#allocation6], 1
    %321 = vsyncpa %s320, 1

</llo_original>
